<compile_context>
chip_gen: v6e
topology: v6e:2x2x1
jax: 0.10.0
libtpu: 0.0.40
codegen_flags: <defaults>
</compile_context>

<pallas_src>
import jax
import jax.numpy as jnp
from jax.experimental import pallas as pl
from jax.experimental.pallas import tpu as pltpu

HIDDEN_DIM = 32
TRUNC_NORM_INIT_STD = 1e-4  # config.trunc_norm_init_std


def _reduce_state_kernel(h_ref, c_ref, wh_ref, bh_ref, wc_ref, bc_ref, o_ref):
    """h_ref/c_ref: (2, B, H); w*: (2H, H); b*: (1, H); o_ref: (B, 2H)."""
    hid = wh_ref.shape[1]

    # h path: equivalent to concat(h[0], h[1], axis=-1) @ W_h + b_h
    h_acc = (
        jnp.dot(h_ref[0], wh_ref[:hid, :], preferred_element_type=jnp.float32)
        + jnp.dot(h_ref[1], wh_ref[hid:, :], preferred_element_type=jnp.float32)
        + bh_ref[...]
    )
    # c path
    c_acc = (
        jnp.dot(c_ref[0], wc_ref[:hid, :], preferred_element_type=jnp.float32)
        + jnp.dot(c_ref[1], wc_ref[hid:, :], preferred_element_type=jnp.float32)
        + bc_ref[...]
    )

    # Single lane-dense (B, 2H) store: [ relu(h) | relu(c) ]
    out = jnp.concatenate(
        [jnp.maximum(h_acc, 0.0), jnp.maximum(c_acc, 0.0)], axis=-1
    )
    o_ref[...] = out.astype(o_ref.dtype)


def _reduce_state_fused(h, c, w_h, b_h, w_c, b_c):
    """One pallas_call computing both reduced states.

    Returns (B, 2H): columns [:H] = reduced h, columns [H:] = reduced c.
    """
    n_dir, batch, hidden = h.shape
    assert n_dir == 2
    return pl.pallas_call(
        _reduce_state_kernel,
        out_shape=jax.ShapeDtypeStruct((batch, 2 * hidden), h.dtype),
        grid=(1,),
        in_specs=[
            pl.BlockSpec((2, batch, hidden), lambda i: (0, 0, 0)),   # h
            pl.BlockSpec((2, batch, hidden), lambda i: (0, 0, 0)),   # c
            pl.BlockSpec((2 * hidden, hidden), lambda i: (0, 0)),    # w_h
            pl.BlockSpec((1, hidden), lambda i: (0, 0)),             # b_h
            pl.BlockSpec((2 * hidden, hidden), lambda i: (0, 0)),    # w_c
            pl.BlockSpec((1, hidden), lambda i: (0, 0)),             # b_c
        ],
        out_specs=pl.BlockSpec((batch, 2 * hidden), lambda i: (0, 0)),
        compiler_params=pltpu.CompilerParams(
            dimension_semantics=("arbitrary",)),
    )(h, c, w_h, b_h, w_c, b_c)


def init_reduce_state_params(key, hidden_dim=HIDDEN_DIM,
                             std=TRUNC_NORM_INIT_STD,
                             dtype=jnp.float32):
    """Matches nn.Linear(hidden*2, hidden) with weight/bias ~ Normal(0, std).
    Weights stored transposed (in, out) = (2H, H); biases stored as (1, H)."""
    k1, k2, k3, k4 = jax.random.split(key, 4)
    w_h = (std * jax.random.normal(k1, (2 * hidden_dim, hidden_dim))).astype(dtype)
    b_h = (std * jax.random.normal(k2, (1, hidden_dim))).astype(dtype)
    w_c = (std * jax.random.normal(k3, (2 * hidden_dim, hidden_dim))).astype(dtype)
    b_c = (std * jax.random.normal(k4, (1, hidden_dim))).astype(dtype)
    return dict(w_h=w_h, b_h=b_h, w_c=w_c, b_c=b_c)


def reduce_state_forward(params, hidden, hidden_dim=HIDDEN_DIM):
    """hidden = (h, c), each (2, batch, hidden_dim).
    Returns (h_red, c_red), each (1, batch, hidden_dim)."""
    h, c = hidden
    n_dir, batch, hd = h.shape
    assert n_dir == 2 and hd == hidden_dim

    out = _reduce_state_fused(h, c,
                              params["w_h"], params["b_h"],
                              params["w_c"], params["b_c"])
    h_red = out[:, :hidden_dim][None, ...]
    c_red = out[:, hidden_dim:][None, ...]
    return h_red, c_red


if __name__ == "__main__":
    batch = 2
    key = jax.random.PRNGKey(0)
    k_param, k_h, k_c = jax.random.split(key, 3)

    params = init_reduce_state_params(k_param)

    h = jax.random.normal(k_h, (2, batch, HIDDEN_DIM), dtype=jnp.float32)
    c = jax.random.normal(k_c, (2, batch, HIDDEN_DIM), dtype=jnp.float32)

    h_red, c_red = reduce_state_forward(params, (h, c))
    jax.block_until_ready((h_red, c_red))

    assert h_red.shape == (1, batch, HIDDEN_DIM)
    assert c_red.shape == (1, batch, HIDDEN_DIM)

    # reference check in plain JAX (mirrors the PyTorch forward exactly)
    h_in = jnp.transpose(h, (1, 0, 2)).reshape(batch, 2 * HIDDEN_DIM)
    c_in = jnp.transpose(c, (1, 0, 2)).reshape(batch, 2 * HIDDEN_DIM)
    ref_h = jnp.maximum(h_in @ params["w_h"] + params["b_h"], 0.0)[None]
    ref_c = jnp.maximum(c_in @ params["w_c"] + params["b_c"], 0.0)[None]
    assert jnp.allclose(h_red, ref_h, atol=1e-5)
    assert jnp.allclose(c_red, ref_c, atol=1e-5)

    print("KERNEL_OK")
</pallas_src>

<mosaic_0001>
module attributes {stable_mosaic.version = 11 : i64} {
  func.func @_reduce_state_kernel(%arg0: i32, %arg1: memref<2x2x32xf32, #tpu.memory_space<vmem>>, %arg2: memref<2x2x32xf32, #tpu.memory_space<vmem>>, %arg3: memref<64x32xf32, #tpu.memory_space<vmem>>, %arg4: memref<1x32xf32, #tpu.memory_space<vmem>>, %arg5: memref<64x32xf32, #tpu.memory_space<vmem>>, %arg6: memref<1x32xf32, #tpu.memory_space<vmem>>, %arg7: memref<2x64xf32, #tpu.memory_space<vmem>>) attributes {dimension_semantics = [#tpu.dimension_semantics<arbitrary>], iteration_bounds = array<i64: 1>, scalar_prefetch = 0 : i64, scratch_operands = 0 : i64, tpu.core_type = #tpu.core_type<tc>, window_params = [{pipeline_mode = #tpu.pipeline_mode<synchronous>, transform_indices = @transform_0, window_bounds = array<i64: 2, 2, 32>}, {pipeline_mode = #tpu.pipeline_mode<synchronous>, transform_indices = @transform_1, window_bounds = array<i64: 2, 2, 32>}, {pipeline_mode = #tpu.pipeline_mode<synchronous>, transform_indices = @transform_2, window_bounds = array<i64: 64, 32>}, {pipeline_mode = #tpu.pipeline_mode<synchronous>, transform_indices = @transform_3, window_bounds = array<i64: 1, 32>}, {pipeline_mode = #tpu.pipeline_mode<synchronous>, transform_indices = @transform_4, window_bounds = array<i64: 64, 32>}, {pipeline_mode = #tpu.pipeline_mode<synchronous>, transform_indices = @transform_5, window_bounds = array<i64: 1, 32>}, {pipeline_mode = #tpu.pipeline_mode<synchronous>, transform_indices = @transform_6, window_bounds = array<i64: 2, 64>}]} {
    %c0 = arith.constant 0 : index
    %c0_0 = arith.constant 0 : index
    %c0_1 = arith.constant 0 : index
    %0 = vector.load %arg1[%c0, %c0_0, %c0_1] : memref<2x2x32xf32, #tpu.memory_space<vmem>>, vector<1x2x32xf32>
    %1 = vector.shape_cast %0 : vector<1x2x32xf32> to vector<2x32xf32>
    %c0_2 = arith.constant 0 : index
    %c0_3 = arith.constant 0 : index
    %2 = vector.load %arg3[%c0_2, %c0_3] : memref<64x32xf32, #tpu.memory_space<vmem>>, vector<32x32xf32>
    %cst = arith.constant dense<0.000000e+00> : vector<2x32xf32>
    %3 = tpu.matmul %1, %2, %cst {dimension_numbers = #tpu.dot_dimension_numbers<[1], [0], [0], [1], [0, 0, 1, 1], [], []>} : vector<2x32xf32>, vector<32x32xf32>, vector<2x32xf32> -> vector<2x32xf32>
    %c1 = arith.constant 1 : index
    %c0_4 = arith.constant 0 : index
    %c0_5 = arith.constant 0 : index
    %4 = vector.load %arg1[%c1, %c0_4, %c0_5] : memref<2x2x32xf32, #tpu.memory_space<vmem>>, vector<1x2x32xf32>
    %5 = vector.shape_cast %4 : vector<1x2x32xf32> to vector<2x32xf32>
    %c32 = arith.constant 32 : index
    %c0_6 = arith.constant 0 : index
    %6 = vector.load %arg3[%c32, %c0_6] : memref<64x32xf32, #tpu.memory_space<vmem>>, vector<32x32xf32>
    %cst_7 = arith.constant dense<0.000000e+00> : vector<2x32xf32>
    %7 = tpu.matmul %5, %6, %cst_7 {dimension_numbers = #tpu.dot_dimension_numbers<[1], [0], [0], [1], [0, 0, 1, 1], [], []>} : vector<2x32xf32>, vector<32x32xf32>, vector<2x32xf32> -> vector<2x32xf32>
    %8 = arith.addf %3, %7 : vector<2x32xf32>
    %c0_8 = arith.constant 0 : index
    %c0_9 = arith.constant 0 : index
    %9 = vector.load %arg4[%c0_8, %c0_9] : memref<1x32xf32, #tpu.memory_space<vmem>>, vector<1x32xf32>
    %10 = vector.broadcast %9 : vector<1x32xf32> to vector<2x32xf32>
    %11 = arith.addf %8, %10 : vector<2x32xf32>
    %c0_10 = arith.constant 0 : index
    %c0_11 = arith.constant 0 : index
    %c0_12 = arith.constant 0 : index
    %12 = vector.load %arg2[%c0_10, %c0_11, %c0_12] : memref<2x2x32xf32, #tpu.memory_space<vmem>>, vector<1x2x32xf32>
    %13 = vector.shape_cast %12 : vector<1x2x32xf32> to vector<2x32xf32>
    %c0_13 = arith.constant 0 : index
    %c0_14 = arith.constant 0 : index
    %14 = vector.load %arg5[%c0_13, %c0_14] : memref<64x32xf32, #tpu.memory_space<vmem>>, vector<32x32xf32>
    %cst_15 = arith.constant dense<0.000000e+00> : vector<2x32xf32>
    %15 = tpu.matmul %13, %14, %cst_15 {dimension_numbers = #tpu.dot_dimension_numbers<[1], [0], [0], [1], [0, 0, 1, 1], [], []>} : vector<2x32xf32>, vector<32x32xf32>, vector<2x32xf32> -> vector<2x32xf32>
    %c1_16 = arith.constant 1 : index
    %c0_17 = arith.constant 0 : index
    %c0_18 = arith.constant 0 : index
    %16 = vector.load %arg2[%c1_16, %c0_17, %c0_18] : memref<2x2x32xf32, #tpu.memory_space<vmem>>, vector<1x2x32xf32>
    %17 = vector.shape_cast %16 : vector<1x2x32xf32> to vector<2x32xf32>
    %c32_19 = arith.constant 32 : index
    %c0_20 = arith.constant 0 : index
    %18 = vector.load %arg5[%c32_19, %c0_20] : memref<64x32xf32, #tpu.memory_space<vmem>>, vector<32x32xf32>
    %cst_21 = arith.constant dense<0.000000e+00> : vector<2x32xf32>
    %19 = tpu.matmul %17, %18, %cst_21 {dimension_numbers = #tpu.dot_dimension_numbers<[1], [0], [0], [1], [0, 0, 1, 1], [], []>} : vector<2x32xf32>, vector<32x32xf32>, vector<2x32xf32> -> vector<2x32xf32>
    %20 = arith.addf %15, %19 : vector<2x32xf32>
    %c0_22 = arith.constant 0 : index
    %c0_23 = arith.constant 0 : index
    %21 = vector.load %arg6[%c0_22, %c0_23] : memref<1x32xf32, #tpu.memory_space<vmem>>, vector<1x32xf32>
    %22 = vector.broadcast %21 : vector<1x32xf32> to vector<2x32xf32>
    %23 = arith.addf %20, %22 : vector<2x32xf32>
    %cst_24 = arith.constant 0.000000e+00 : f32
    %24 = vector.broadcast %cst_24 : f32 to vector<2x32xf32>
    %25 = arith.maximumf %11, %24 : vector<2x32xf32>
    %cst_25 = arith.constant 0.000000e+00 : f32
    %26 = vector.broadcast %cst_25 : f32 to vector<2x32xf32>
    %27 = arith.maximumf %23, %26 : vector<2x32xf32>
    %28 = tpu.concatenate %25, %27 in 1 : vector<2x32xf32>, vector<2x32xf32> -> vector<2x64xf32>
    %c0_26 = arith.constant 0 : index
    %c0_27 = arith.constant 0 : index
    %29 = vector.load %arg7[%c0_26, %c0_27] : memref<2x64xf32, #tpu.memory_space<vmem>>, vector<2x64xf32>
    tpu.vector_store %arg7[%c0_26, %c0_27], %28 {strides = array<i32>} : memref<2x64xf32, #tpu.memory_space<vmem>>, vector<2x64xf32>,
    return
  }
  func.func @transform_0(%arg0: i32) -> (i32, i32, i32) {
    %c0_i32 = arith.constant 0 : i32
    %c0_i32_0 = arith.constant 0 : i32
    %c0_i32_1 = arith.constant 0 : i32
    %c0_i32_2 = arith.constant 0 : i32
    return %c0_i32, %c0_i32_0, %c0_i32_1 : i32, i32, i32
  }
  func.func @transform_1(%arg0: i32) -> (i32, i32, i32) {
    %c0_i32 = arith.constant 0 : i32
    %c0_i32_0 = arith.constant 0 : i32
    %c0_i32_1 = arith.constant 0 : i32
    %c0_i32_2 = arith.constant 0 : i32
    return %c0_i32, %c0_i32_0, %c0_i32_1 : i32, i32, i32
  }
  func.func @transform_2(%arg0: i32) -> (i32, i32) {
    %c0_i32 = arith.constant 0 : i32
    %c0_i32_0 = arith.constant 0 : i32
    %c0_i32_1 = arith.constant 0 : i32
    return %c0_i32, %c0_i32_0 : i32, i32
  }
  func.func @transform_3(%arg0: i32) -> (i32, i32) {
    %c0_i32 = arith.constant 0 : i32
    %c0_i32_0 = arith.constant 0 : i32
    %c0_i32_1 = arith.constant 0 : i32
    return %c0_i32, %c0_i32_0 : i32, i32
  }
  func.func @transform_4(%arg0: i32) -> (i32, i32) {
    %c0_i32 = arith.constant 0 : i32
    %c0_i32_0 = arith.constant 0 : i32
    %c0_i32_1 = arith.constant 0 : i32
    return %c0_i32, %c0_i32_0 : i32, i32
  }
  func.func @transform_5(%arg0: i32) -> (i32, i32) {
    %c0_i32 = arith.constant 0 : i32
    %c0_i32_0 = arith.constant 0 : i32
    %c0_i32_1 = arith.constant 0 : i32
    return %c0_i32, %c0_i32_0 : i32, i32
  }
  func.func @transform_6(%arg0: i32) -> (i32, i32) {
    %c0_i32 = arith.constant 0 : i32
    %c0_i32_0 = arith.constant 0 : i32
    %c0_i32_1 = arith.constant 0 : i32
    return %c0_i32, %c0_i32_0 : i32, i32
  }
}

</mosaic_0001>

<llo_original>
// kernel: tpu_custom_call.1
$region0: #{tpu_custom_call.1}
  #allocation0 [shape = 'u32[]', space=smem, size = 0x4, offset = 0x4, fixed_abs, tag = 'smem constant byte address 0x4 - core index']
  #allocation1 [shape = 'u32[144,128]{1,0:T(1,128)}', space=vmem, size = 0x12000, scoped, tag = 'internal scratch']
  %s0 = inlined_call_operand.vmem [shape: f32[2,2,32], index: 0, kind: input, shape index: {}]
  %s1 = inlined_call_operand.vmem [shape: f32[2,2,32], index: 1, kind: input, shape index: {}]
  %s2 = inlined_call_operand.vmem [shape: f32[64,32], index: 2, kind: input, shape index: {}]
  %s3 = inlined_call_operand.vmem [shape: f32[1,32], index: 3, kind: input, shape index: {}]
  %s4 = inlined_call_operand.vmem [shape: f32[64,32], index: 4, kind: input, shape index: {}]
  %s5 = inlined_call_operand.vmem [shape: f32[1,32], index: 5, kind: input, shape index: {}]
  %s6 = inlined_call_operand.hbm [shape: f32[2,64], index: 6, kind: output, shape index: {}]
  %s7 = sld [smem:[#allocation0]]
  $region34: #{tpu_custom_call.1} parent=0
    _
  %s9 = ssub.s32 1, %s7
  %s10 = scalar_select 0, %s9, %s7
  $region1: #{tpu_custom_call.1} parent=0
    #allocation2 [shape = 'u8[1024]{0}', space=vmem, size = 0x400, scoped, tag = 'output window, operand 0, single buffered']
    #allocation3 [shape = 's32[1]{0}', space=sflag, size = 0x4, scoped, tag = 'scoped memory for tpu_custom_call.1']
    %11 = vsyncpa [#allocation3], 0
    // Predicated region
    $region2: #{tpu_custom_call.1} parent=1 // pred_check
      _
    $region3: #{tpu_custom_call.1} parent=1 // pred_check_branch
      %13 = sbr.rel (0) target = $region5
    $region4: #{tpu_custom_call.1} parent=1 // pred_region
      _
    $region5: #{tpu_custom_call.1} parent=1 // pred_fallthru
      _
    // Predicated region
    $region6: #{tpu_custom_call.1} parent=1 // pred_check
      _
    $region7: #{tpu_custom_call.1} parent=1 // pred_check_branch
      %15 = sbr.rel (0) target = $region9
    $region8: #{tpu_custom_call.1} parent=1 // pred_region
      _
    $region9: #{tpu_custom_call.1} parent=1 // pred_fallthru
      _
    // Predicated region
    $region10: #{tpu_custom_call.1} parent=1 // pred_check
      _
    $region11: #{tpu_custom_call.1} parent=1 // pred_check_branch
      %17 = sbr.rel (0) target = $region13
    $region12: #{tpu_custom_call.1} parent=1 // pred_region
      _
    $region13: #{tpu_custom_call.1} parent=1 // pred_fallthru
      _
    // Predicated region
    $region14: #{tpu_custom_call.1} parent=1 // pred_check
      _
    $region15: #{tpu_custom_call.1} parent=1 // pred_check_branch
      %19 = sbr.rel (0) target = $region17
    $region16: #{tpu_custom_call.1} parent=1 // pred_region
      _
    $region17: #{tpu_custom_call.1} parent=1 // pred_fallthru
      _
    // Predicated region
    $region18: #{tpu_custom_call.1} parent=1 // pred_check
      _
    $region19: #{tpu_custom_call.1} parent=1 // pred_check_branch
      %21 = sbr.rel (0) target = $region21
    $region20: #{tpu_custom_call.1} parent=1 // pred_region
      _
    $region21: #{tpu_custom_call.1} parent=1 // pred_fallthru
      _
    // Predicated region
    $region22: #{tpu_custom_call.1} parent=1 // pred_check
      _
    $region23: #{tpu_custom_call.1} parent=1 // pred_check_branch
      %23 = sbr.rel (0) target = $region25
    $region24: #{tpu_custom_call.1} parent=1 // pred_region
      _
    $region25: #{tpu_custom_call.1} parent=1 // pred_fallthru
      _
    %v24 = vld [vmem:[%s0] sm:$0x3]
    %v25 = vld [vmem:[%s2] sm:$0xff]
    %v26 = vld [vmem:[%s2 + $0x8] sm:$0xff]
    %v27 = vld [vmem:[%s2 + $0x10] sm:$0xff]
    %v28 = vld [vmem:[%s2 + $0x18] sm:$0xff]
    %s29 = scalar_lea.vmem %s0, 2
    %v30 = vld [vmem:[%s29] sm:$0x3]
    %v31 = vld [vmem:[%s2 + $0x20] sm:$0xff]
    %v32 = vld [vmem:[%s2 + $0x28] sm:$0xff]
    %v33 = vld [vmem:[%s2 + $0x30] sm:$0xff]
    %v34 = vld [vmem:[%s2 + $0x38] sm:$0xff]
    %vm35 = vcmask 261120
    %v37 = vsel %vm35, %v30, 0
    %39 = vmatprep.subr.mxu0 0.0
    %40 = vmatpush1.msra.mxu0 0.0
    %41 = vmatprep.subr.mxu0 0.0
    %42 = vmatpush1.msra.mxu0 0.0
    %43 = vmatprep.subr.mxu0 0.0
    %44 = vmatpush1.msra.mxu0 0.0
    %45 = vmatprep.subr.mxu0 0.0
    %46 = vmatpush1.msra.mxu0 0.0
    %47 = vmatprep.subr.mxu0 0.0
    %48 = vmatpush1.msra.mxu0 0.0
    %49 = vmatprep.subr.mxu0 0.0
    %50 = vmatpush1.msra.mxu0 0.0
    %51 = vmatprep.subr.mxu0 0.0
    %52 = vmatpush1.msra.mxu0 0.0
    %53 = vmatprep.subr.mxu0 0.0
    %54 = vmatpush1.msra.mxu0 0.0
    %55 = vmatprep.subr.mxu0 0.0
    %56 = vmatpush1.msra.mxu0 0.0
    %57 = vmatprep.subr.mxu0 0.0
    %58 = vmatpush1.msra.mxu0 0.0
    %59 = vmatprep.subr.mxu0 0.0
    %60 = vmatpush1.msra.mxu0 0.0
    %61 = vmatprep.subr.mxu0 0.0
    %62 = vmatpush1.msra.mxu0 0.0
    %63 = vmatprep.subr.mxu0 0.0
    %64 = vmatpush1.msra.mxu0 %v34
    %65 = vmatprep.subr.mxu0 0.0
    %66 = vmatpush1.msra.mxu0 %v33
    %67 = vmatprep.subr.mxu0 0.0
    %68 = vmatpush1.msra.mxu0 %v32
    %69 = vmatprep.subr.mxu0 0.0
    %70 = vmatpush1.msra.mxu0 %v31
    %71 = vmatprep.subr.mxu0 0.0
    %72 = vmatpush2.msra.mxu0 0.0
    %73 = vmatprep.subr.mxu0 0.0
    %74 = vmatpush2.msra.mxu0 0.0
    %75 = vmatprep.subr.mxu0 0.0
    %76 = vmatpush2.msra.mxu0 0.0
    %77 = vmatprep.subr.mxu0 0.0
    %78 = vmatpush2.msra.mxu0 0.0
    %79 = vmatprep.subr.mxu0 0.0
    %80 = vmatpush2.msra.mxu0 0.0
    %81 = vmatprep.subr.mxu0 0.0
    %82 = vmatpush2.msra.mxu0 0.0
    %83 = vmatprep.subr.mxu0 0.0
    %84 = vmatpush2.msra.mxu0 0.0
    %85 = vmatprep.subr.mxu0 0.0
    %86 = vmatpush2.msra.mxu0 0.0
    %87 = vmatprep.subr.mxu0 0.0
    %88 = vmatpush2.msra.mxu0 0.0
    %89 = vmatprep.subr.mxu0 0.0
    %90 = vmatpush2.msra.mxu0 0.0
    %91 = vmatprep.subr.mxu0 0.0
    %92 = vmatpush2.msra.mxu0 0.0
    %93 = vmatprep.subr.mxu0 0.0
    %94 = vmatpush2.msra.mxu0 0.0
    %95 = vmatprep.subr.mxu0 0.0
    %96 = vmatpush2.msra.mxu0 0.0
    %97 = vmatprep.subr.mxu0 0.0
    %98 = vmatpush2.msra.mxu0 0.0
    %99 = vmatprep.subr.mxu0 0.0
    %100 = vmatpush2.msra.mxu0 0.0
    %101 = vmatprep.subr.mxu0 0.0
    %102 = vmatpush2.msra.mxu0 0.0
    %103 = vmatprep.mubr.f32.mxu0 0.0
    %104 = vmatmul.mubr.f32.gmra.mxu0 %v37
    %v105 = vpop.f32.mrf.mxu0
    %v106 = vadd.f32 0.0, %v105
    %v107 = vpop.f32.mrf.mxu0
    %108 = vdwg.mxu0
    %v110 = vsel %vm35, %v24, 0
    %112 = vmatprep.subr.mxu0 0.0
    %113 = vmatpush1.msra.mxu0 0.0
    %114 = vmatprep.subr.mxu0 0.0
    %115 = vmatpush1.msra.mxu0 0.0
    %116 = vmatprep.subr.mxu0 0.0
    %117 = vmatpush1.msra.mxu0 0.0
    %118 = vmatprep.subr.mxu0 0.0
    %119 = vmatpush1.msra.mxu0 0.0
    %120 = vmatprep.subr.mxu0 0.0
    %121 = vmatpush1.msra.mxu0 0.0
    %122 = vmatprep.subr.mxu0 0.0
    %123 = vmatpush1.msra.mxu0 0.0
    %124 = vmatprep.subr.mxu0 0.0
    %125 = vmatpush1.msra.mxu0 0.0
    %126 = vmatprep.subr.mxu0 0.0
    %127 = vmatpush1.msra.mxu0 0.0
    %128 = vmatprep.subr.mxu0 0.0
    %129 = vmatpush1.msra.mxu0 0.0
    %130 = vmatprep.subr.mxu0 0.0
    %131 = vmatpush1.msra.mxu0 0.0
    %132 = vmatprep.subr.mxu0 0.0
    %133 = vmatpush1.msra.mxu0 0.0
    %134 = vmatprep.subr.mxu0 0.0
    %135 = vmatpush1.msra.mxu0 0.0
    %136 = vmatprep.subr.mxu0 0.0
    %137 = vmatpush1.msra.mxu0 %v28
    %138 = vmatprep.subr.mxu0 0.0
    %139 = vmatpush1.msra.mxu0 %v27
    %140 = vmatprep.subr.mxu0 0.0
    %141 = vmatpush1.msra.mxu0 %v26
    %142 = vmatprep.subr.mxu0 0.0
    %143 = vmatpush1.msra.mxu0 %v25
    %144 = vmatprep.subr.mxu0 0.0
    %145 = vmatpush2.msra.mxu0 0.0
    %146 = vmatprep.subr.mxu0 0.0
    %147 = vmatpush2.msra.mxu0 0.0
    %148 = vmatprep.subr.mxu0 0.0
    %149 = vmatpush2.msra.mxu0 0.0
    %150 = vmatprep.subr.mxu0 0.0
    %151 = vmatpush2.msra.mxu0 0.0
    %152 = vmatprep.subr.mxu0 0.0
    %153 = vmatpush2.msra.mxu0 0.0
    %154 = vmatprep.subr.mxu0 0.0
    %155 = vmatpush2.msra.mxu0 0.0
    %156 = vmatprep.subr.mxu0 0.0
    %157 = vmatpush2.msra.mxu0 0.0
    %158 = vmatprep.subr.mxu0 0.0
    %159 = vmatpush2.msra.mxu0 0.0
    %160 = vmatprep.subr.mxu0 0.0
    %161 = vmatpush2.msra.mxu0 0.0
    %162 = vmatprep.subr.mxu0 0.0
    %163 = vmatpush2.msra.mxu0 0.0
    %164 = vmatprep.subr.mxu0 0.0
    %165 = vmatpush2.msra.mxu0 0.0
    %166 = vmatprep.subr.mxu0 0.0
    %167 = vmatpush2.msra.mxu0 0.0
    %168 = vmatprep.subr.mxu0 0.0
    %169 = vmatpush2.msra.mxu0 0.0
    %170 = vmatprep.subr.mxu0 0.0
    %171 = vmatpush2.msra.mxu0 0.0
    %172 = vmatprep.subr.mxu0 0.0
    %173 = vmatpush2.msra.mxu0 0.0
    %174 = vmatprep.subr.mxu0 0.0
    %175 = vmatpush2.msra.mxu0 0.0
    %176 = vmatprep.mubr.f32.mxu0 0.0
    %177 = vmatmul.mubr.f32.gmra.mxu0 %v110
    %v178 = vpop.f32.mrf.mxu0
    %v179 = vadd.f32 %v106, %v178
    %v180 = vpop.f32.mrf.mxu0
    %181 = vdwg.mxu0
    %v182 = vld [vmem:[%s3] sm:$0x1]
    %v184 = vlaneseq
    %v185 = vshrl.u32 %v184, 7
    %v186 = vsub.s32 0, %v185
    %v187 = vrot.slane %v182, %v186
    %v189 = vadd.f32 %v179, %v187
    %v190 = vld [vmem:[%s1] sm:$0x3]
    %v191 = vld [vmem:[%s4] sm:$0xff]
    %v192 = vld [vmem:[%s4 + $0x8] sm:$0xff]
    %v193 = vld [vmem:[%s4 + $0x10] sm:$0xff]
    %v194 = vld [vmem:[%s4 + $0x18] sm:$0xff]
    %s195 = scalar_lea.vmem %s1, 2
    %v196 = vld [vmem:[%s195] sm:$0x3]
    %v197 = vld [vmem:[%s4 + $0x20] sm:$0xff]
    %v198 = vld [vmem:[%s4 + $0x28] sm:$0xff]
    %v199 = vld [vmem:[%s4 + $0x30] sm:$0xff]
    %v200 = vld [vmem:[%s4 + $0x38] sm:$0xff]
    %v202 = vsel %vm35, %v196, 0
    %204 = vmatprep.subr.mxu0 0.0
    %205 = vmatpush1.msra.mxu0 0.0
    %206 = vmatprep.subr.mxu0 0.0
    %207 = vmatpush1.msra.mxu0 0.0
    %208 = vmatprep.subr.mxu0 0.0
    %209 = vmatpush1.msra.mxu0 0.0
    %210 = vmatprep.subr.mxu0 0.0
    %211 = vmatpush1.msra.mxu0 0.0
    %212 = vmatprep.subr.mxu0 0.0
    %213 = vmatpush1.msra.mxu0 0.0
    %214 = vmatprep.subr.mxu0 0.0
    %215 = vmatpush1.msra.mxu0 0.0
    %216 = vmatprep.subr.mxu0 0.0
    %217 = vmatpush1.msra.mxu0 0.0
    %218 = vmatprep.subr.mxu0 0.0
    %219 = vmatpush1.msra.mxu0 0.0
    %220 = vmatprep.subr.mxu0 0.0
    %221 = vmatpush1.msra.mxu0 0.0
    %222 = vmatprep.subr.mxu0 0.0
    %223 = vmatpush1.msra.mxu0 0.0
    %224 = vmatprep.subr.mxu0 0.0
    %225 = vmatpush1.msra.mxu0 0.0
    %226 = vmatprep.subr.mxu0 0.0
    %227 = vmatpush1.msra.mxu0 0.0
    %228 = vmatprep.subr.mxu0 0.0
    %229 = vmatpush1.msra.mxu0 %v200
    %230 = vmatprep.subr.mxu0 0.0
    %231 = vmatpush1.msra.mxu0 %v199
    %232 = vmatprep.subr.mxu0 0.0
    %233 = vmatpush1.msra.mxu0 %v198
    %234 = vmatprep.subr.mxu0 0.0
    %235 = vmatpush1.msra.mxu0 %v197
    %236 = vmatprep.subr.mxu0 0.0
    %237 = vmatpush2.msra.mxu0 0.0
    %238 = vmatprep.subr.mxu0 0.0
    %239 = vmatpush2.msra.mxu0 0.0
    %240 = vmatprep.subr.mxu0 0.0
    %241 = vmatpush2.msra.mxu0 0.0
    %242 = vmatprep.subr.mxu0 0.0
    %243 = vmatpush2.msra.mxu0 0.0
    %244 = vmatprep.subr.mxu0 0.0
    %245 = vmatpush2.msra.mxu0 0.0
    %246 = vmatprep.subr.mxu0 0.0
    %247 = vmatpush2.msra.mxu0 0.0
    %248 = vmatprep.subr.mxu0 0.0
    %249 = vmatpush2.msra.mxu0 0.0
    %250 = vmatprep.subr.mxu0 0.0
    %251 = vmatpush2.msra.mxu0 0.0
    %252 = vmatprep.subr.mxu0 0.0
    %253 = vmatpush2.msra.mxu0 0.0
    %254 = vmatprep.subr.mxu0 0.0
    %255 = vmatpush2.msra.mxu0 0.0
    %256 = vmatprep.subr.mxu0 0.0
    %257 = vmatpush2.msra.mxu0 0.0
    %258 = vmatprep.subr.mxu0 0.0
    %259 = vmatpush2.msra.mxu0 0.0
    %260 = vmatprep.subr.mxu0 0.0
    %261 = vmatpush2.msra.mxu0 0.0
    %262 = vmatprep.subr.mxu0 0.0
    %263 = vmatpush2.msra.mxu0 0.0
    %264 = vmatprep.subr.mxu0 0.0
    %265 = vmatpush2.msra.mxu0 0.0
    %266 = vmatprep.subr.mxu0 0.0
    %267 = vmatpush2.msra.mxu0 0.0
    %268 = vmatprep.mubr.f32.mxu0 0.0
    %269 = vmatmul.mubr.f32.gmra.mxu0 %v202
    %v270 = vpop.f32.mrf.mxu0
    %v271 = vadd.f32 0.0, %v270
    %v272 = vpop.f32.mrf.mxu0
    %273 = vdwg.mxu0
    %v275 = vsel %vm35, %v190, 0
    %277 = vmatprep.subr.mxu0 0.0
    %278 = vmatpush1.msra.mxu0 0.0
    %279 = vmatprep.subr.mxu0 0.0
    %280 = vmatpush1.msra.mxu0 0.0
    %281 = vmatprep.subr.mxu0 0.0
    %282 = vmatpush1.msra.mxu0 0.0
    %283 = vmatprep.subr.mxu0 0.0
    %284 = vmatpush1.msra.mxu0 0.0
    %285 = vmatprep.subr.mxu0 0.0
    %286 = vmatpush1.msra.mxu0 0.0
    %287 = vmatprep.subr.mxu0 0.0
    %288 = vmatpush1.msra.mxu0 0.0
    %289 = vmatprep.subr.mxu0 0.0
    %290 = vmatpush1.msra.mxu0 0.0
    %291 = vmatprep.subr.mxu0 0.0
    %292 = vmatpush1.msra.mxu0 0.0
    %293 = vmatprep.subr.mxu0 0.0
    %294 = vmatpush1.msra.mxu0 0.0
    %295 = vmatprep.subr.mxu0 0.0
    %296 = vmatpush1.msra.mxu0 0.0
    %297 = vmatprep.subr.mxu0 0.0
    %298 = vmatpush1.msra.mxu0 0.0
    %299 = vmatprep.subr.mxu0 0.0
    %300 = vmatpush1.msra.mxu0 0.0
    %301 = vmatprep.subr.mxu0 0.0
    %302 = vmatpush1.msra.mxu0 %v194
    %303 = vmatprep.subr.mxu0 0.0
    %304 = vmatpush1.msra.mxu0 %v193
    %305 = vmatprep.subr.mxu0 0.0
    %306 = vmatpush1.msra.mxu0 %v192
    %307 = vmatprep.subr.mxu0 0.0
    %308 = vmatpush1.msra.mxu0 %v191
    %309 = vmatprep.subr.mxu0 0.0
    %310 = vmatpush2.msra.mxu0 0.0
    %311 = vmatprep.subr.mxu0 0.0
    %312 = vmatpush2.msra.mxu0 0.0
    %313 = vmatprep.subr.mxu0 0.0
    %314 = vmatpush2.msra.mxu0 0.0
    %315 = vmatprep.subr.mxu0 0.0
    %316 = vmatpush2.msra.mxu0 0.0
    %317 = vmatprep.subr.mxu0 0.0
    %318 = vmatpush2.msra.mxu0 0.0
    %319 = vmatprep.subr.mxu0 0.0
    %320 = vmatpush2.msra.mxu0 0.0
    %321 = vmatprep.subr.mxu0 0.0
    %322 = vmatpush2.msra.mxu0 0.0
    %323 = vmatprep.subr.mxu0 0.0
    %324 = vmatpush2.msra.mxu0 0.0
    %325 = vmatprep.subr.mxu0 0.0
    %326 = vmatpush2.msra.mxu0 0.0
    %327 = vmatprep.subr.mxu0 0.0
    %328 = vmatpush2.msra.mxu0 0.0
    %329 = vmatprep.subr.mxu0 0.0
    %330 = vmatpush2.msra.mxu0 0.0
    %331 = vmatprep.subr.mxu0 0.0
    %332 = vmatpush2.msra.mxu0 0.0
    %333 = vmatprep.subr.mxu0 0.0
    %334 = vmatpush2.msra.mxu0 0.0
    %335 = vmatprep.subr.mxu0 0.0
    %336 = vmatpush2.msra.mxu0 0.0
    %337 = vmatprep.subr.mxu0 0.0
    %338 = vmatpush2.msra.mxu0 0.0
    %339 = vmatprep.subr.mxu0 0.0
    %340 = vmatpush2.msra.mxu0 0.0
    %341 = vmatprep.mubr.f32.mxu0 0.0
    %342 = vmatmul.mubr.f32.gmra.mxu0 %v275
    %v343 = vpop.f32.mrf.mxu0
    %v344 = vadd.f32 %v271, %v343
    %v345 = vpop.f32.mrf.mxu0
    %346 = vdwg.mxu0
    %v347 = vld [vmem:[%s5] sm:$0x1]
    %v349 = vlaneseq
    %v350 = vshrl.u32 %v349, 7
    %v351 = vsub.s32 0, %v350
    %v352 = vrot.slane %v347, %v351
    %v354 = vadd.f32 %v344, %v352
    %v355 = vmax.f32 %v189, 0.0
    %v356 = vmax.f32 %v354, 0.0
    %358 = vrot.lane.b32.xlu0 %v356, 32
    %v359 = vpop.permute.xlu0 %358
    %v361 = vsel %vm35, %v355, %v359
    %vm362 = vcmask 517120
    %363 = vst.msk [vmem:[#allocation2] sm:$0x3] %vm362, %v361
    // Predicated region
    $region26: #{tpu_custom_call.1} parent=1 // pred_check
      _
    $region27: #{tpu_custom_call.1} parent=1 // pred_check_branch
      %365 = sbr.rel (0) target = $region29
    $region28: #{tpu_custom_call.1} parent=1 // pred_region
      %s367 = ssub.s32 32, 32
      %368 = vsyncadd [#allocation3], %s367
      %s370 = sshll.u32 [#allocation2], 4
      %s371 = int_to_ptr.vmem [resolvable:$true] %s370
      %373 = dma.vmem_to_hbm [thread:$0]  %s371, 32, %s6, [#allocation3]
    $region29: #{tpu_custom_call.1} parent=1 // pred_fallthru
      _
    // Predicated region
    $region30: #{tpu_custom_call.1} parent=1 // pred_check
      _
    $region31: #{tpu_custom_call.1} parent=1 // pred_check_branch
      %375 = sbr.rel (0) target = $region33
    $region32: #{tpu_custom_call.1} parent=1 // pred_region
      %376 = dma.done [#allocation3], 32
    $region33: #{tpu_custom_call.1} parent=1 // pred_fallthru
      _
    %377 = vsyncpa [#allocation3], 1

</llo_original>
